<compile_context>
chip_gen: v6e
topology: v6e:2x2x1
jax: 0.10.0
libtpu: 0.0.40
codegen_flags: <defaults>
</compile_context>

<pallas_src>
import jax
import jax.numpy as jnp
from jax.experimental import pallas as pl
from jax.experimental.pallas import tpu as pltpu


def adapter_kernel(x_ref, gamma_ref, beta_ref, w1_ref, b1_ref, w2_ref, b2_ref,
                   o_ref):
    x = x_ref[...].astype(jnp.float32)                      # (tm, H)

    # LayerNorm over hidden (last) axis, single-pass stats, eps = 1e-5 (torch).
    mean = jnp.mean(x, axis=-1, keepdims=True)
    mean_sq = jnp.mean(x * x, axis=-1, keepdims=True)
    var = jnp.maximum(mean_sq - mean * mean, 0.0)
    inv = jax.lax.rsqrt(var + 1e-5)
    scale = inv * gamma_ref[...].astype(jnp.float32)        # (tm, H)
    x_ln = (x - mean) * scale + beta_ref[...].astype(jnp.float32)

    # fc1 + relu (H -> Dp): bf16 MXU operands, f32 accumulation.
    h = jnp.dot(x_ln.astype(jnp.bfloat16), w1_ref[...],
                preferred_element_type=jnp.float32)
    h = jnp.maximum(h + b1_ref[...].astype(jnp.float32), 0.0)

    # fc2 (Dp -> H): bf16 MXU operands, f32 accumulation.
    y = jnp.dot(h.astype(jnp.bfloat16), w2_ref[...],
                preferred_element_type=jnp.float32)
    y = y + b2_ref[...].astype(jnp.float32)

    # Residual (residual_before_ln=True). Re-read the resident x tile instead
    # of keeping a separate f32 copy live across both matmuls.
    o_ref[...] = (y + x_ref[...].astype(jnp.float32)).astype(o_ref.dtype)


def _round_up(n, m):
    return ((n + m - 1) // m) * m


def _default_vmem_limit_bytes():
    try:
        cap = pltpu.get_tpu_info().vmem_capacity_bytes
    except Exception:
        cap = 128 * 1024 * 1024
    # Leave ~1/8 headroom; cap at 100 MiB (v5e/v6e have 128 MiB, v7x 64 MiB).
    return min(100 * 1024 * 1024, (cap * 7) // 8)


def adapter_forward(x, gamma, beta, w1, b1, w2, b2, *, tm=256,
                    pad_down_to=128, vmem_limit_bytes=None):
    T, H = x.shape
    D = w1.shape[1]
    out_dtype = x.dtype

    # --- Lane-dense bottleneck dim: zero-pad D up to a multiple of 128. -----
    Dp = _round_up(D, pad_down_to) if pad_down_to else D
    if Dp != D:
        w1 = jnp.pad(w1, ((0, 0), (0, Dp - D)))
        b1 = jnp.pad(b1, ((0, 0), (0, Dp - D)))
        w2 = jnp.pad(w2, ((0, Dp - D), (0, 0)))

    # --- bf16 weights: native MXU input dtype, halves weight DMA/VMEM. ------
    w1 = w1.astype(jnp.bfloat16)
    w2 = w2.astype(jnp.bfloat16)

    # --- Row tile: large (MXU-filling), a multiple of 8, dividing padded T. --
    tm = _round_up(max(8, min(tm, T)), 8)
    # Keep at least 2 grid steps so a "parallel" axis can split across v7x TCs.
    if T > 8 and _round_up(T, tm) // tm < 2:
        tm = _round_up(max(8, (T + 1) // 2), 8)
    Tp = _round_up(T, tm)
    if Tp != T:
        x = jnp.pad(x, ((0, Tp - T), (0, 0)))
    grid = (Tp // tm,)

    if vmem_limit_bytes is None:
        vmem_limit_bytes = _default_vmem_limit_bytes()

    itemsize = jnp.dtype(out_dtype).itemsize
    cost = pl.CostEstimate(
        flops=4 * Tp * H * Dp + 10 * Tp * H,
        transcendentals=Tp,
        bytes_accessed=(2 * Tp * H * itemsize          # x in + out
                        + (w1.size + w2.size) * 2      # bf16 weights
                        + (b1.size + b2.size + gamma.size + beta.size) * 4),
    )

    def _run(single_buffer_weights):
        pipeline_mode = pl.Buffered(1) if single_buffer_weights else None

        def const_spec(shape):
            # Constant-index blocks: same tile every grid step (DMA'd once).
            if pipeline_mode is None:
                return pl.BlockSpec(shape, lambda i: (0,) * len(shape))
            return pl.BlockSpec(shape, lambda i: (0,) * len(shape),
                                pipeline_mode=pipeline_mode)

        return pl.pallas_call(
            adapter_kernel,
            out_shape=jax.ShapeDtypeStruct((Tp, H), out_dtype),
            grid_spec=pltpu.PrefetchScalarGridSpec(
                num_scalar_prefetch=0,
                grid=grid,
                in_specs=[
                    pl.BlockSpec((tm, H), lambda i: (i, 0)),   # x tile
                    const_spec((1, H)),                        # LN gamma
                    const_spec((1, H)),                        # LN beta
                    const_spec((H, Dp)),                       # W1 (in, out)
                    const_spec((1, Dp)),                       # b1
                    const_spec((Dp, H)),                       # W2 (in, out)
                    const_spec((1, H)),                        # b2
                ],
                out_specs=pl.BlockSpec((tm, H), lambda i: (i, 0)),
            ),
            compiler_params=pltpu.CompilerParams(
                dimension_semantics=("parallel",),
                vmem_limit_bytes=vmem_limit_bytes),
            cost_estimate=cost,
        )(x, gamma, beta, w1, b1, w2, b2)

    try:
        out = _run(single_buffer_weights=True)
    except Exception:
        # TODO(synk): pipeline_mode=pl.Buffered(1) not supported on this jax
        # build; fall back to default double-buffered constant blocks.
        out = _run(single_buffer_weights=False)

    return out[:T] if Tp != T else out


def init_params(key, input_size, down_sample):
    # init_bert_params: Linear.weight ~ N(0, 0.02), Linear.bias = 0,
    # LayerNorm.weight = 1, LayerNorm.bias = 0.
    k1, k2 = jax.random.split(key)
    w1 = 0.02 * jax.random.normal(k1, (input_size, down_sample), jnp.float32)
    b1 = jnp.zeros((1, down_sample), jnp.float32)
    w2 = 0.02 * jax.random.normal(k2, (down_sample, input_size), jnp.float32)
    b2 = jnp.zeros((1, input_size), jnp.float32)
    gamma = jnp.ones((1, input_size), jnp.float32)
    beta = jnp.zeros((1, input_size), jnp.float32)
    return gamma, beta, w1, b1, w2, b2


def adapter_ref(x, gamma, beta, w1, b1, w2, b2):
    # Pure-JAX f32 reference of the same forward pass.
    mean = jnp.mean(x, axis=-1, keepdims=True)
    var = jnp.mean((x - mean) ** 2, axis=-1, keepdims=True)
    x_ln = (x - mean) * jax.lax.rsqrt(var + 1e-5) * gamma + beta
    h = jnp.maximum(x_ln @ w1 + b1, 0.0)
    y = h @ w2 + b2
    return y + x


def _check(seq, batch, hidden, down_sample, seed):
    key = jax.random.PRNGKey(seed)
    kx, kp = jax.random.split(key)

    # Input in fairseq convention (seq, batch, hidden); flatten tokens.
    x3 = jax.random.normal(kx, (seq, batch, hidden), jnp.float32)
    x = x3.reshape(seq * batch, hidden)

    gamma, beta, w1, b1, w2, b2 = init_params(kp, hidden, down_sample)

    out = adapter_forward(x, gamma, beta, w1, b1, w2, b2)
    out = jax.block_until_ready(out)

    ref = adapter_ref(x, gamma, beta, w1, b1, w2, b2)
    assert out.shape == (seq * batch, hidden)
    # Loosened tolerance: kernel uses bf16 MXU operands (f32 accumulation).
    assert jnp.allclose(out, ref, atol=1e-2, rtol=1e-2)

    # Reshape back to (seq, batch, hidden) if the 3-D view is needed.
    _ = out.reshape(seq, batch, hidden)
    return out


if __name__ == "__main__":
    # Toy shapes (module spec: down_sample defaults to input_size // 2).
    _check(seq=8, batch=2, hidden=32, down_sample=16, seed=0)
    # Lane-aligned path: exercises tm=256 tiles, Dp multiple of 128, padding.
    _check(seq=100, batch=3, hidden=256, down_sample=128, seed=0)

    print("KERNEL_OK")
</pallas_src>

<mosaic_0001>
module attributes {stable_mosaic.version = 11 : i64} {
  func.func @adapter_kernel(%arg0: i32, %arg1: memref<8x32xf32, #tpu.memory_space<vmem>>, %arg2: memref<1x32xf32, #tpu.memory_space<vmem>>, %arg3: memref<1x32xf32, #tpu.memory_space<vmem>>, %arg4: memref<32x128xbf16, #tpu.memory_space<vmem>>, %arg5: memref<1x128xf32, #tpu.memory_space<vmem>>, %arg6: memref<128x32xbf16, #tpu.memory_space<vmem>>, %arg7: memref<1x32xf32, #tpu.memory_space<vmem>>, %arg8: memref<8x32xf32, #tpu.memory_space<vmem>>) attributes {dimension_semantics = [#tpu.dimension_semantics<parallel>], iteration_bounds = array<i64: 2>, scalar_prefetch = 0 : i64, scratch_operands = 0 : i64, tpu.core_type = #tpu.core_type<tc>, window_params = [{transform_indices = @transform_0, window_bounds = array<i64: 8, 32>}, {pipeline_mode = #tpu.pipeline_mode<synchronous>, transform_indices = @transform_1, window_bounds = array<i64: 1, 32>}, {pipeline_mode = #tpu.pipeline_mode<synchronous>, transform_indices = @transform_2, window_bounds = array<i64: 1, 32>}, {pipeline_mode = #tpu.pipeline_mode<synchronous>, transform_indices = @transform_3, window_bounds = array<i64: 32, 128>}, {pipeline_mode = #tpu.pipeline_mode<synchronous>, transform_indices = @transform_4, window_bounds = array<i64: 1, 128>}, {pipeline_mode = #tpu.pipeline_mode<synchronous>, transform_indices = @transform_5, window_bounds = array<i64: 128, 32>}, {pipeline_mode = #tpu.pipeline_mode<synchronous>, transform_indices = @transform_6, window_bounds = array<i64: 1, 32>}, {transform_indices = @transform_7, window_bounds = array<i64: 8, 32>}]} {
    %c0 = arith.constant 0 : index
    %c0_0 = arith.constant 0 : index
    %0 = vector.load %arg1[%c0, %c0_0] : memref<8x32xf32, #tpu.memory_space<vmem>>, vector<8x32xf32>
    %cst = arith.constant dense<0.000000e+00> : vector<8xf32>
    %1 = vector.multi_reduction <add>, %0, %cst [1] : vector<8x32xf32> to vector<8xf32>
    %2 = vector.shape_cast %1 : vector<8xf32> to vector<8x1xf32>
    %cst_1 = arith.constant 3.200000e+01 : f32
    %3 = vector.broadcast %cst_1 : f32 to vector<8x1xf32>
    %4 = arith.divf %2, %3 : vector<8x1xf32>
    %5 = arith.mulf %0, %0 : vector<8x32xf32>
    %cst_2 = arith.constant dense<0.000000e+00> : vector<8xf32>
    %6 = vector.multi_reduction <add>, %5, %cst_2 [1] : vector<8x32xf32> to vector<8xf32>
    %7 = vector.shape_cast %6 : vector<8xf32> to vector<8x1xf32>
    %cst_3 = arith.constant 3.200000e+01 : f32
    %8 = vector.broadcast %cst_3 : f32 to vector<8x1xf32>
    %9 = arith.divf %7, %8 : vector<8x1xf32>
    %10 = arith.mulf %4, %4 : vector<8x1xf32>
    %11 = arith.subf %9, %10 : vector<8x1xf32>
    %cst_4 = arith.constant 0.000000e+00 : f32
    %12 = vector.broadcast %cst_4 : f32 to vector<8x1xf32>
    %13 = arith.maximumf %11, %12 : vector<8x1xf32>
    %cst_5 = arith.constant 9.99999974E-6 : f32
    %14 = vector.broadcast %cst_5 : f32 to vector<8x1xf32>
    %15 = arith.addf %13, %14 : vector<8x1xf32>
    %16 = math.rsqrt %15 : vector<8x1xf32>
    %c0_6 = arith.constant 0 : index
    %c0_7 = arith.constant 0 : index
    %17 = vector.load %arg2[%c0_6, %c0_7] : memref<1x32xf32, #tpu.memory_space<vmem>>, vector<1x32xf32>
    %18 = vector.broadcast %16 : vector<8x1xf32> to vector<8x32xf32>
    %19 = vector.broadcast %17 : vector<1x32xf32> to vector<8x32xf32>
    %20 = arith.mulf %18, %19 : vector<8x32xf32>
    %21 = vector.broadcast %4 : vector<8x1xf32> to vector<8x32xf32>
    %22 = arith.subf %0, %21 : vector<8x32xf32>
    %23 = arith.mulf %22, %20 : vector<8x32xf32>
    %c0_8 = arith.constant 0 : index
    %c0_9 = arith.constant 0 : index
    %24 = vector.load %arg3[%c0_8, %c0_9] : memref<1x32xf32, #tpu.memory_space<vmem>>, vector<1x32xf32>
    %25 = vector.broadcast %24 : vector<1x32xf32> to vector<8x32xf32>
    %26 = arith.addf %23, %25 : vector<8x32xf32>
    %27 = arith.truncf %26 : vector<8x32xf32> to vector<8x32xbf16>
    %c0_10 = arith.constant 0 : index
    %c0_11 = arith.constant 0 : index
    %28 = vector.load %arg4[%c0_10, %c0_11] : memref<32x128xbf16, #tpu.memory_space<vmem>>, vector<32x128xbf16>
    %cst_12 = arith.constant dense<0.000000e+00> : vector<8x128xf32>
    %29 = tpu.matmul %27, %28, %cst_12 {dimension_numbers = #tpu.dot_dimension_numbers<[1], [0], [0], [1], [0, 0, 1, 1], [], []>} : vector<8x32xbf16>, vector<32x128xbf16>, vector<8x128xf32> -> vector<8x128xf32>
    %c0_13 = arith.constant 0 : index
    %c0_14 = arith.constant 0 : index
    %30 = vector.load %arg5[%c0_13, %c0_14] : memref<1x128xf32, #tpu.memory_space<vmem>>, vector<1x128xf32>
    %31 = vector.broadcast %30 : vector<1x128xf32> to vector<8x128xf32>
    %32 = arith.addf %29, %31 : vector<8x128xf32>
    %cst_15 = arith.constant 0.000000e+00 : f32
    %33 = vector.broadcast %cst_15 : f32 to vector<8x128xf32>
    %34 = arith.maximumf %32, %33 : vector<8x128xf32>
    %35 = arith.truncf %34 : vector<8x128xf32> to vector<8x128xbf16>
    %c0_16 = arith.constant 0 : index
    %c0_17 = arith.constant 0 : index
    %36 = vector.load %arg6[%c0_16, %c0_17] : memref<128x32xbf16, #tpu.memory_space<vmem>>, vector<128x32xbf16>
    %cst_18 = arith.constant dense<0.000000e+00> : vector<8x32xf32>
    %37 = tpu.matmul %35, %36, %cst_18 {dimension_numbers = #tpu.dot_dimension_numbers<[1], [0], [0], [1], [0, 0, 1, 1], [], []>} : vector<8x128xbf16>, vector<128x32xbf16>, vector<8x32xf32> -> vector<8x32xf32>
    %c0_19 = arith.constant 0 : index
    %c0_20 = arith.constant 0 : index
    %38 = vector.load %arg7[%c0_19, %c0_20] : memref<1x32xf32, #tpu.memory_space<vmem>>, vector<1x32xf32>
    %39 = vector.broadcast %38 : vector<1x32xf32> to vector<8x32xf32>
    %40 = arith.addf %37, %39 : vector<8x32xf32>
    %c0_21 = arith.constant 0 : index
    %c0_22 = arith.constant 0 : index
    %41 = vector.load %arg1[%c0_21, %c0_22] : memref<8x32xf32, #tpu.memory_space<vmem>>, vector<8x32xf32>
    %42 = arith.addf %40, %41 : vector<8x32xf32>
    %c0_23 = arith.constant 0 : index
    %c0_24 = arith.constant 0 : index
    %43 = vector.load %arg8[%c0_23, %c0_24] : memref<8x32xf32, #tpu.memory_space<vmem>>, vector<8x32xf32>
    tpu.vector_store %arg8[%c0_23, %c0_24], %42 {strides = array<i32>} : memref<8x32xf32, #tpu.memory_space<vmem>>, vector<8x32xf32>,
    return
  }
  func.func @transform_0(%arg0: i32) -> (i32, i32) {
    %c0_i32 = arith.constant 0 : i32
    %c0_i32_0 = arith.constant 0 : i32
    return %arg0, %c0_i32 : i32, i32
  }
  func.func @transform_1(%arg0: i32) -> (i32, i32) {
    %c0_i32 = arith.constant 0 : i32
    %c0_i32_0 = arith.constant 0 : i32
    %c0_i32_1 = arith.constant 0 : i32
    return %c0_i32, %c0_i32_0 : i32, i32
  }
  func.func @transform_2(%arg0: i32) -> (i32, i32) {
    %c0_i32 = arith.constant 0 : i32
    %c0_i32_0 = arith.constant 0 : i32
    %c0_i32_1 = arith.constant 0 : i32
    return %c0_i32, %c0_i32_0 : i32, i32
  }
  func.func @transform_3(%arg0: i32) -> (i32, i32) {
    %c0_i32 = arith.constant 0 : i32
    %c0_i32_0 = arith.constant 0 : i32
    %c0_i32_1 = arith.constant 0 : i32
    return %c0_i32, %c0_i32_0 : i32, i32
  }
  func.func @transform_4(%arg0: i32) -> (i32, i32) {
    %c0_i32 = arith.constant 0 : i32
    %c0_i32_0 = arith.constant 0 : i32
    %c0_i32_1 = arith.constant 0 : i32
    return %c0_i32, %c0_i32_0 : i32, i32
  }
  func.func @transform_5(%arg0: i32) -> (i32, i32) {
    %c0_i32 = arith.constant 0 : i32
    %c0_i32_0 = arith.constant 0 : i32
    %c0_i32_1 = arith.constant 0 : i32
    return %c0_i32, %c0_i32_0 : i32, i32
  }
  func.func @transform_6(%arg0: i32) -> (i32, i32) {
    %c0_i32 = arith.constant 0 : i32
    %c0_i32_0 = arith.constant 0 : i32
    %c0_i32_1 = arith.constant 0 : i32
    return %c0_i32, %c0_i32_0 : i32, i32
  }
  func.func @transform_7(%arg0: i32) -> (i32, i32) {
    %c0_i32 = arith.constant 0 : i32
    %c0_i32_0 = arith.constant 0 : i32
    return %arg0, %c0_i32 : i32, i32
  }
}

module attributes {stable_mosaic.version = 11 : i64} {
  func.func @adapter_kernel(%arg0: i32, %arg1: memref<8x32xf32, #tpu.memory_space<vmem>>, %arg2: memref<1x32xf32, #tpu.memory_space<vmem>>, %arg3: memref<1x32xf32, #tpu.memory_space<vmem>>, %arg4: memref<32x128xbf16, #tpu.memory_space<vmem>>, %arg5: memref<1x128xf32, #tpu.memory_space<vmem>>, %arg6: memref<128x32xbf16, #tpu.memory_space<vmem>>, %arg7: memref<1x32xf32, #tpu.memory_space<vmem>>, %arg8: memref<8x32xf32, #tpu.memory_space<vmem>>) attributes {dimension_semantics = [#tpu.dimension_semantics<parallel>], iteration_bounds = array<i64: 2>, scalar_prefetch = 0 : i64, scratch_operands = 0 : i64, tpu.core_type = #tpu.core_type<tc>, window_params = [{transform_indices = @transform_0, window_bounds = array<i64: 8, 32>}, {pipeline_mode = #tpu.pipeline_mode<synchronous>, transform_indices = @transform_1, window_bounds = array<i64: 1, 32>}, {pipeline_mode = #tpu.pipeline_mode<synchronous>, transform_indices = @transform_2, window_bounds = array<i64: 1, 32>}, {pipeline_mode = #tpu.pipeline_mode<synchronous>, transform_indices = @transform_3, window_bounds = array<i64: 32, 128>}, {pipeline_mode = #tpu.pipeline_mode<synchronous>, transform_indices = @transform_4, window_bounds = array<i64: 1, 128>}, {pipeline_mode = #tpu.pipeline_mode<synchronous>, transform_indices = @transform_5, window_bounds = array<i64: 128, 32>}, {pipeline_mode = #tpu.pipeline_mode<synchronous>, transform_indices = @transform_6, window_bounds = array<i64: 1, 32>}, {transform_indices = @transform_7, window_bounds = array<i64: 8, 32>}]} {
    %c0 = arith.constant 0 : index
    %c0_0 = arith.constant 0 : index
    %0 = vector.load %arg1[%c0, %c0_0] : memref<8x32xf32, #tpu.memory_space<vmem>>, vector<8x32xf32>
    %cst = arith.constant dense<0.000000e+00> : vector<8xf32>
    %1 = vector.multi_reduction <add>, %0, %cst [1] : vector<8x32xf32> to vector<8xf32>
    %2 = vector.shape_cast %1 : vector<8xf32> to vector<8x1xf32>
    %cst_1 = arith.constant 3.200000e+01 : f32
    %3 = vector.broadcast %cst_1 : f32 to vector<8x1xf32>
    %4 = arith.divf %2, %3 : vector<8x1xf32>
    %5 = arith.mulf %0, %0 : vector<8x32xf32>
    %cst_2 = arith.constant dense<0.000000e+00> : vector<8xf32>
    %6 = vector.multi_reduction <add>, %5, %cst_2 [1] : vector<8x32xf32> to vector<8xf32>
    %7 = vector.shape_cast %6 : vector<8xf32> to vector<8x1xf32>
    %cst_3 = arith.constant 3.200000e+01 : f32
    %8 = vector.broadcast %cst_3 : f32 to vector<8x1xf32>
    %9 = arith.divf %7, %8 : vector<8x1xf32>
    %10 = arith.mulf %4, %4 : vector<8x1xf32>
    %11 = arith.subf %9, %10 : vector<8x1xf32>
    %cst_4 = arith.constant 0.000000e+00 : f32
    %12 = vector.broadcast %cst_4 : f32 to vector<8x1xf32>
    %13 = arith.maximumf %11, %12 : vector<8x1xf32>
    %cst_5 = arith.constant 9.99999974E-6 : f32
    %14 = vector.broadcast %cst_5 : f32 to vector<8x1xf32>
    %15 = arith.addf %13, %14 : vector<8x1xf32>
    %16 = math.rsqrt %15 : vector<8x1xf32>
    %c0_6 = arith.constant 0 : index
    %c0_7 = arith.constant 0 : index
    %17 = vector.load %arg2[%c0_6, %c0_7] : memref<1x32xf32, #tpu.memory_space<vmem>>, vector<1x32xf32>
    %18 = vector.broadcast %16 : vector<8x1xf32> to vector<8x32xf32>
    %19 = vector.broadcast %17 : vector<1x32xf32> to vector<8x32xf32>
    %20 = arith.mulf %18, %19 : vector<8x32xf32>
    %21 = vector.broadcast %4 : vector<8x1xf32> to vector<8x32xf32>
    %22 = arith.subf %0, %21 : vector<8x32xf32>
    %23 = arith.mulf %22, %20 : vector<8x32xf32>
    %c0_8 = arith.constant 0 : index
    %c0_9 = arith.constant 0 : index
    %24 = vector.load %arg3[%c0_8, %c0_9] : memref<1x32xf32, #tpu.memory_space<vmem>>, vector<1x32xf32>
    %25 = vector.broadcast %24 : vector<1x32xf32> to vector<8x32xf32>
    %26 = arith.addf %23, %25 : vector<8x32xf32>
    %27 = arith.truncf %26 : vector<8x32xf32> to vector<8x32xbf16>
    %c0_10 = arith.constant 0 : index
    %c0_11 = arith.constant 0 : index
    %28 = vector.load %arg4[%c0_10, %c0_11] : memref<32x128xbf16, #tpu.memory_space<vmem>>, vector<32x128xbf16>
    %cst_12 = arith.constant dense<0.000000e+00> : vector<8x128xf32>
    %29 = tpu.matmul %27, %28, %cst_12 {dimension_numbers = #tpu.dot_dimension_numbers<[1], [0], [0], [1], [0, 0, 1, 1], [], []>} : vector<8x32xbf16>, vector<32x128xbf16>, vector<8x128xf32> -> vector<8x128xf32>
    %c0_13 = arith.constant 0 : index
    %c0_14 = arith.constant 0 : index
    %30 = vector.load %arg5[%c0_13, %c0_14] : memref<1x128xf32, #tpu.memory_space<vmem>>, vector<1x128xf32>
    %31 = vector.broadcast %30 : vector<1x128xf32> to vector<8x128xf32>
    %32 = arith.addf %29, %31 : vector<8x128xf32>
    %cst_15 = arith.constant 0.000000e+00 : f32
    %33 = vector.broadcast %cst_15 : f32 to vector<8x128xf32>
    %34 = arith.maximumf %32, %33 : vector<8x128xf32>
    %35 = arith.truncf %34 : vector<8x128xf32> to vector<8x128xbf16>
    %c0_16 = arith.constant 0 : index
    %c0_17 = arith.constant 0 : index
    %36 = vector.load %arg6[%c0_16, %c0_17] : memref<128x32xbf16, #tpu.memory_space<vmem>>, vector<128x32xbf16>
    %cst_18 = arith.constant dense<0.000000e+00> : vector<8x32xf32>
    %37 = tpu.matmul %35, %36, %cst_18 {dimension_numbers = #tpu.dot_dimension_numbers<[1], [0], [0], [1], [0, 0, 1, 1], [], []>} : vector<8x128xbf16>, vector<128x32xbf16>, vector<8x32xf32> -> vector<8x32xf32>
    %c0_19 = arith.constant 0 : index
    %c0_20 = arith.constant 0 : index
    %38 = vector.load %arg7[%c0_19, %c0_20] : memref<1x32xf32, #tpu.memory_space<vmem>>, vector<1x32xf32>
    %39 = vector.broadcast %38 : vector<1x32xf32> to vector<8x32xf32>
    %40 = arith.addf %37, %39 : vector<8x32xf32>
    %c0_21 = arith.constant 0 : index
    %c0_22 = arith.constant 0 : index
    %41 = vector.load %arg1[%c0_21, %c0_22] : memref<8x32xf32, #tpu.memory_space<vmem>>, vector<8x32xf32>
    %42 = arith.addf %40, %41 : vector<8x32xf32>
    %c0_23 = arith.constant 0 : index
    %c0_24 = arith.constant 0 : index
    %43 = vector.load %arg8[%c0_23, %c0_24] : memref<8x32xf32, #tpu.memory_space<vmem>>, vector<8x32xf32>
    tpu.vector_store %arg8[%c0_23, %c0_24], %42 {strides = array<i32>} : memref<8x32xf32, #tpu.memory_space<vmem>>, vector<8x32xf32>,
    return
  }
  func.func @transform_0(%arg0: i32) -> (i32, i32) {
    %c0_i32 = arith.constant 0 : i32
    %c0_i32_0 = arith.constant 0 : i32
    return %arg0, %c0_i32 : i32, i32
  }
  func.func @transform_1(%arg0: i32) -> (i32, i32) {
    %c0_i32 = arith.constant 0 : i32
    %c0_i32_0 = arith.constant 0 : i32
    %c0_i32_1 = arith.constant 0 : i32
    return %c0_i32, %c0_i32_0 : i32, i32
  }
  func.func @transform_2(%arg0: i32) -> (i32, i32) {
    %c0_i32 = arith.constant 0 : i32
    %c0_i32_0 = arith.constant 0 : i32
    %c0_i32_1 = arith.constant 0 : i32
    return %c0_i32, %c0_i32_0 : i32, i32
  }
  func.func @transform_3(%arg0: i32) -> (i32, i32) {
    %c0_i32 = arith.constant 0 : i32
    %c0_i32_0 = arith.constant 0 : i32
    %c0_i32_1 = arith.constant 0 : i32
    return %c0_i32, %c0_i32_0 : i32, i32
  }
  func.func @transform_4(%arg0: i32) -> (i32, i32) {
    %c0_i32 = arith.constant 0 : i32
    %c0_i32_0 = arith.constant 0 : i32
    %c0_i32_1 = arith.constant 0 : i32
    return %c0_i32, %c0_i32_0 : i32, i32
  }
  func.func @transform_5(%arg0: i32) -> (i32, i32) {
    %c0_i32 = arith.constant 0 : i32
    %c0_i32_0 = arith.constant 0 : i32
    %c0_i32_1 = arith.constant 0 : i32
    return %c0_i32, %c0_i32_0 : i32, i32
  }
  func.func @transform_6(%arg0: i32) -> (i32, i32) {
    %c0_i32 = arith.constant 0 : i32
    %c0_i32_0 = arith.constant 0 : i32
    %c0_i32_1 = arith.constant 0 : i32
    return %c0_i32, %c0_i32_0 : i32, i32
  }
  func.func @transform_7(%arg0: i32) -> (i32, i32) {
    %c0_i32 = arith.constant 0 : i32
    %c0_i32_0 = arith.constant 0 : i32
    return %arg0, %c0_i32 : i32, i32
  }
}

</mosaic_0001>

<llo_original>
// kernel: tpu_custom_call.1
$region0: #{tpu_custom_call.1}
  #allocation0 [shape = 'u32[]', space=smem, size = 0x4, offset = 0x4, fixed_abs, tag = 'smem constant byte address 0x4 - core index']
  #allocation1 [shape = 'u32[144,128]{1,0:T(1,128)}', space=vmem, size = 0x12000, scoped, tag = 'internal scratch']
  %s0 = inlined_call_operand.vmem [shape: f32[16,32], index: 0, kind: input, shape index: {}]
  %s1 = inlined_call_operand.vmem [shape: f32[1,32], index: 1, kind: input, shape index: {}]
  %s2 = inlined_call_operand.vmem [shape: f32[1,32], index: 2, kind: input, shape index: {}]
  %s3 = inlined_call_operand.vmem [shape: bf16[32,128], index: 3, kind: input, shape index: {}]
  %s4 = inlined_call_operand.vmem [shape: f32[1,128], index: 4, kind: input, shape index: {}]
  %s5 = inlined_call_operand.vmem [shape: bf16[128,32], index: 5, kind: input, shape index: {}]
  %s6 = inlined_call_operand.vmem [shape: f32[1,32], index: 6, kind: input, shape index: {}]
  %s7 = inlined_call_operand.hbm [shape: f32[16,32], index: 7, kind: output, shape index: {}]
  %s8 = sld [smem:[#allocation0]]
  $region61: #{tpu_custom_call.1} parent=0
    _
  %s10 = ssub.s32 1, %s8
  %s11 = scalar_select 0, %s10, %s8
  $region1: #{tpu_custom_call.1} parent=0
    #allocation2 [shape = 'u8[8192]{0}', space=vmem, size = 0x2000, scoped, tag = 'output window, operand 0']
    #allocation3 [shape = 's32[2]{0}', space=sflag, size = 0x8, scoped, tag = 'scoped memory for tpu_custom_call.1']
    %12 = vsyncpa [#allocation3], 0
    %s13 = scalar_lea.sflag [#allocation3], 1
    %14 = vsyncpa %s13, 0
    loop: start=0, step=1, limit=4
    $region2: #{tpu_custom_call.1} parent=1 // loop_pre_header
      _
    $region3: #{tpu_custom_call.1} parent=1 // loop_header
      %s16 = sphi 0, %s20
      %p17 = scmp.ge.s32.totalorder %s16, 4
      %s26 = sphi 0, %s28
      %s29 = sphi 0, %s26
      %s30 = sphi 0, %s29
      %s46 = sphi 0, %s30
      %s50 = sphi 0, %s50
      %s52 = sphi 0, %s50
      %s53 = sphi 0, %s52
      %s67 = sphi 0, %s53
      %s71 = sphi 0, %s71
      %s73 = sphi 0, %s71
      %s74 = sphi 0, %s73
      %s88 = sphi 0, %s74
      %s92 = sphi 0, %s92
      %s94 = sphi 0, %s92
      %s95 = sphi 0, %s94
      %s109 = sphi 0, %s95
      %s113 = sphi 0, %s113
      %s115 = sphi 0, %s113
      %s116 = sphi 0, %s115
      %s130 = sphi 0, %s116
      %s134 = sphi 0, %s134
      %s136 = sphi 0, %s134
      %s137 = sphi 0, %s136
      %s151 = sphi 0, %s137
      %s155 = sphi 0, %s155
      %s157 = sphi 0, %s155
      %s158 = sphi 0, %s157
      %s172 = sphi 0, %s158
      %s178 = sphi 0, %s180
      %s181 = sphi 0, %s178
      %s182 = sphi 0, %s181
      %s198 = sphi 0, %s182
    $region4: #{tpu_custom_call.1} parent=1 // loop_header_branch
      %19 = sbr.rel (%p17) target = $region8
    $region5: #{tpu_custom_call.1} parent=1 // loop_body
      %s21 = ssub.s32 %s16, 1
      %s22 = ssub.s32 %s16, 2
      %s23 = sadd.s32 %s16, 1
      %s24 = ssub.s32 %s16, %s23
      %p25 = scmp.eq.s32.totalorder %s24, 0
      %s27 = sadd.s32 %s26, 1
      %s28 = scalar_select %p25, %s26, %s27
      %p31 = pneg %p25
      %p32 = scmp.eq.s32.totalorder %s16, 1
      %p33 = por %p31, %p32
      %p34 = scmp.ne.s32.totalorder %s26, %s29
      %p35 = scmp.eq.s32.totalorder %s16, 0
      %p36 = por %p34, %p35
      %p37 = scmp.ne.s32.totalorder %s26, %s29
      %p38 = scmp.eq.s32.totalorder %s21, 1
      %p39 = por %p37, %p38
      %p40 = scmp.ne.s32.totalorder %s29, %s30
      %p41 = scmp.eq.s32.totalorder %s21, 0
      %p42 = por %p40, %p41
      %p43 = scmp.ne.s32.totalorder %s29, %s30
      %p44 = scmp.eq.s32.totalorder %s22, 1
      %p45 = por %p43, %p44
      %p47 = scmp.ne.s32.totalorder %s30, %s46
      %p48 = scmp.eq.s32.totalorder %s22, 0
      %p49 = por %p47, %p48
      %s51 = sadd.s32 %s50, 1
      %p54 = scmp.eq.s32.totalorder %s16, 1
      %p55 = scmp.ne.s32.totalorder %s50, %s52
      %p56 = scmp.eq.s32.totalorder %s16, 0
      %p57 = por %p55, %p56
      %p58 = scmp.ne.s32.totalorder %s50, %s52
      %p59 = scmp.eq.s32.totalorder %s21, 1
      %p60 = por %p58, %p59
      %p61 = scmp.ne.s32.totalorder %s52, %s53
      %p62 = scmp.eq.s32.totalorder %s21, 0
      %p63 = por %p61, %p62
      %p64 = scmp.ne.s32.totalorder %s52, %s53
      %p65 = scmp.eq.s32.totalorder %s22, 1
      %p66 = por %p64, %p65
      %p68 = scmp.ne.s32.totalorder %s53, %s67
      %p69 = scmp.eq.s32.totalorder %s22, 0
      %p70 = por %p68, %p69
      %s72 = sadd.s32 %s71, 1
      %p75 = scmp.eq.s32.totalorder %s16, 1
      %p76 = scmp.ne.s32.totalorder %s71, %s73
      %p77 = scmp.eq.s32.totalorder %s16, 0
      %p78 = por %p76, %p77
      %p79 = scmp.ne.s32.totalorder %s71, %s73
      %p80 = scmp.eq.s32.totalorder %s21, 1
      %p81 = por %p79, %p80
      %p82 = scmp.ne.s32.totalorder %s73, %s74
      %p83 = scmp.eq.s32.totalorder %s21, 0
      %p84 = por %p82, %p83
      %p85 = scmp.ne.s32.totalorder %s73, %s74
      %p86 = scmp.eq.s32.totalorder %s22, 1
      %p87 = por %p85, %p86
      %p89 = scmp.ne.s32.totalorder %s74, %s88
      %p90 = scmp.eq.s32.totalorder %s22, 0
      %p91 = por %p89, %p90
      %s93 = sadd.s32 %s92, 1
      %p96 = scmp.eq.s32.totalorder %s16, 1
      %p97 = scmp.ne.s32.totalorder %s92, %s94
      %p98 = scmp.eq.s32.totalorder %s16, 0
      %p99 = por %p97, %p98
      %p100 = scmp.ne.s32.totalorder %s92, %s94
      %p101 = scmp.eq.s32.totalorder %s21, 1
      %p102 = por %p100, %p101
      %p103 = scmp.ne.s32.totalorder %s94, %s95
      %p104 = scmp.eq.s32.totalorder %s21, 0
      %p105 = por %p103, %p104
      %p106 = scmp.ne.s32.totalorder %s94, %s95
      %p107 = scmp.eq.s32.totalorder %s22, 1
      %p108 = por %p106, %p107
      %p110 = scmp.ne.s32.totalorder %s95, %s109
      %p111 = scmp.eq.s32.totalorder %s22, 0
      %p112 = por %p110, %p111
      %s114 = sadd.s32 %s113, 1
      %p117 = scmp.eq.s32.totalorder %s16, 1
      %p118 = scmp.ne.s32.totalorder %s113, %s115
      %p119 = scmp.eq.s32.totalorder %s16, 0
      %p120 = por %p118, %p119
      %p121 = scmp.ne.s32.totalorder %s113, %s115
      %p122 = scmp.eq.s32.totalorder %s21, 1
      %p123 = por %p121, %p122
      %p124 = scmp.ne.s32.totalorder %s115, %s116
      %p125 = scmp.eq.s32.totalorder %s21, 0
      %p126 = por %p124, %p125
      %p127 = scmp.ne.s32.totalorder %s115, %s116
      %p128 = scmp.eq.s32.totalorder %s22, 1
      %p129 = por %p127, %p128
      %p131 = scmp.ne.s32.totalorder %s116, %s130
      %p132 = scmp.eq.s32.totalorder %s22, 0
      %p133 = por %p131, %p132
      %s135 = sadd.s32 %s134, 1
      %p138 = scmp.eq.s32.totalorder %s16, 1
      %p139 = scmp.ne.s32.totalorder %s134, %s136
      %p140 = scmp.eq.s32.totalorder %s16, 0
      %p141 = por %p139, %p140
      %p142 = scmp.ne.s32.totalorder %s134, %s136
      %p143 = scmp.eq.s32.totalorder %s21, 1
      %p144 = por %p142, %p143
      %p145 = scmp.ne.s32.totalorder %s136, %s137
      %p146 = scmp.eq.s32.totalorder %s21, 0
      %p147 = por %p145, %p146
      %p148 = scmp.ne.s32.totalorder %s136, %s137
      %p149 = scmp.eq.s32.totalorder %s22, 1
      %p150 = por %p148, %p149
      %p152 = scmp.ne.s32.totalorder %s137, %s151
      %p153 = scmp.eq.s32.totalorder %s22, 0
      %p154 = por %p152, %p153
      %s156 = sadd.s32 %s155, 1
      %p159 = scmp.eq.s32.totalorder %s16, 1
      %p160 = scmp.ne.s32.totalorder %s155, %s157
      %p161 = scmp.eq.s32.totalorder %s16, 0
      %p162 = por %p160, %p161
      %p163 = scmp.ne.s32.totalorder %s155, %s157
      %p164 = scmp.eq.s32.totalorder %s21, 1
      %p165 = por %p163, %p164
      %p166 = scmp.ne.s32.totalorder %s157, %s158
      %p167 = scmp.eq.s32.totalorder %s21, 0
      %p168 = por %p166, %p167
      %p169 = scmp.ne.s32.totalorder %s157, %s158
      %p170 = scmp.eq.s32.totalorder %s22, 1
      %p171 = por %p169, %p170
      %p173 = scmp.ne.s32.totalorder %s158, %s172
      %p174 = scmp.eq.s32.totalorder %s22, 0
      %p175 = por %p173, %p174
      %s176 = ssub.s32 %s16, %s23
      %p177 = scmp.eq.s32.totalorder %s176, 0
      %s179 = sadd.s32 %s178, 1
      %s180 = scalar_select %p177, %s178, %s179
      %p183 = pneg %p177
      %p184 = scmp.eq.s32.totalorder %s16, 1
      %p185 = por %p183, %p184
      %p186 = scmp.ne.s32.totalorder %s178, %s181
      %p187 = scmp.eq.s32.totalorder %s16, 0
      %p188 = por %p186, %p187
      %p189 = scmp.ne.s32.totalorder %s178, %s181
      %p190 = scmp.eq.s32.totalorder %s21, 1
      %p191 = por %p189, %p190
      %p192 = scmp.ne.s32.totalorder %s181, %s182
      %p193 = scmp.eq.s32.totalorder %s21, 0
      %p194 = por %p192, %p193
      %p195 = scmp.ne.s32.totalorder %s181, %s182
      %p196 = scmp.eq.s32.totalorder %s22, 1
      %p197 = por %p195, %p196
      %p199 = scmp.ne.s32.totalorder %s182, %s198
      %p200 = scmp.eq.s32.totalorder %s22, 0
      %p201 = por %p199, %p200
      %p202 = scmp.le.s32.totalorder 1, %s16
      %p203 = scmp.lt.s32.totalorder %s16, 3
      %p204 = pnand %p202, %p203
      %p205 = pneg %p204
      // Predicated region
      $region9: #{tpu_custom_call.1} parent=5 // pred_check
        _
      $region10: #{tpu_custom_call.1} parent=5 // pred_check_branch
        %207 = sbr.rel (%p204) target = $region12
      $region11: #{tpu_custom_call.1} parent=5 // pred_region
        %s208 = ssub.s32 %s16, 1
        // Predicated region
        $region13: #{tpu_custom_call.1} parent=11 // pred_check
          %p209 = pneg %p63
        $region14: #{tpu_custom_call.1} parent=11 // pred_check_branch
          %211 = sbr.rel (%p209) target = $region16
        $region15: #{tpu_custom_call.1} parent=11 // pred_region
          _
        $region16: #{tpu_custom_call.1} parent=11 // pred_fallthru
          _
        // Predicated region
        $region17: #{tpu_custom_call.1} parent=11 // pred_check
          %p212 = pneg %p84
        $region18: #{tpu_custom_call.1} parent=11 // pred_check_branch
          %214 = sbr.rel (%p212) target = $region20
        $region19: #{tpu_custom_call.1} parent=11 // pred_region
          _
        $region20: #{tpu_custom_call.1} parent=11 // pred_fallthru
          _
        // Predicated region
        $region21: #{tpu_custom_call.1} parent=11 // pred_check
          %p215 = pneg %p105
        $region22: #{tpu_custom_call.1} parent=11 // pred_check_branch
          %217 = sbr.rel (%p215) target = $region24
        $region23: #{tpu_custom_call.1} parent=11 // pred_region
          _
        $region24: #{tpu_custom_call.1} parent=11 // pred_fallthru
          _
        // Predicated region
        $region25: #{tpu_custom_call.1} parent=11 // pred_check
          %p218 = pneg %p126
        $region26: #{tpu_custom_call.1} parent=11 // pred_check_branch
          %220 = sbr.rel (%p218) target = $region28
        $region27: #{tpu_custom_call.1} parent=11 // pred_region
          _
        $region28: #{tpu_custom_call.1} parent=11 // pred_fallthru
          _
        // Predicated region
        $region29: #{tpu_custom_call.1} parent=11 // pred_check
          %p221 = pneg %p147
        $region30: #{tpu_custom_call.1} parent=11 // pred_check_branch
          %223 = sbr.rel (%p221) target = $region32
        $region31: #{tpu_custom_call.1} parent=11 // pred_region
          _
        $region32: #{tpu_custom_call.1} parent=11 // pred_fallthru
          _
        // Predicated region
        $region33: #{tpu_custom_call.1} parent=11 // pred_check
          %p224 = pneg %p168
        $region34: #{tpu_custom_call.1} parent=11 // pred_check_branch
          %226 = sbr.rel (%p224) target = $region36
        $region35: #{tpu_custom_call.1} parent=11 // pred_region
          _
        $region36: #{tpu_custom_call.1} parent=11 // pred_fallthru
          _
      $region12: #{tpu_custom_call.1} parent=5 // pred_fallthru
        _
      %p227 = scmp.lt.s32.totalorder %s16, 2
      // Predicated region
      $region37: #{tpu_custom_call.1} parent=5 // pred_check
        %p228 = pneg %p227
      $region38: #{tpu_custom_call.1} parent=5 // pred_check_branch
        %230 = sbr.rel (%p228) target = $region40
      $region39: #{tpu_custom_call.1} parent=5 // pred_region
        // Predicated region
        $region41: #{tpu_custom_call.1} parent=39 // pred_check
          %p231 = pneg %p36
        $region42: #{tpu_custom_call.1} parent=39 // pred_check_branch
          %233 = sbr.rel (%p231) target = $region44
        $region43: #{tpu_custom_call.1} parent=39 // pred_region
          %p234 = scmp.lt.s32.totalorder %s16, 1
          %s235 = scalar_select %p234, %s16, 1
          %s236 = smul.addr %s235, 8
          %s237 = scalar_lea.vmem %s0, %s236
        $region44: #{tpu_custom_call.1} parent=39 // pred_fallthru
          _
      $region40: #{tpu_custom_call.1} parent=5 // pred_fallthru
        _
      %p238 = scmp.le.s32.totalorder 1, %s16
      %p239 = scmp.lt.s32.totalorder %s16, 3
      %p240 = pnand %p238, %p239
      %p241 = pneg %p240
      // Predicated region
      $region45: #{tpu_custom_call.1} parent=5 // pred_check
        _
      $region46: #{tpu_custom_call.1} parent=5 // pred_check_branch
        %243 = sbr.rel (%p240) target = $region48
      $region47: #{tpu_custom_call.1} parent=5 // pred_region
        %s244 = ssub.s32 %s16, 1
        %p245 = scmp.lt.s32.totalorder %s21, 1
        %s246 = scalar_select %p245, %s21, 1
        %s247 = smul.addr %s246, 8
        %s248 = scalar_lea.vmem %s0, %s247
        %p249 = pneg %p42
        %p250 = pneg %p39
        %p251 = pneg %p63
        %p252 = pneg %p60
        %p253 = pneg %p84
        %p254 = pneg %p81
        %p255 = pneg %p105
        %p256 = pneg %p102
        %p257 = pneg %p126
        %p258 = pneg %p123
        %p259 = pneg %p147
        %p260 = pneg %p144
        %p261 = pneg %p168
        %p262 = pneg %p165
        %p263 = pneg %p194
        %p264 = pneg %p191
        %s265 = sand.u32 %s181, 1
        %s266 = scalar_lea.sflag [#allocation3], %s265
        %s267 = sand.u32 %s181, 1
        %s268 = smul.addr %s267, 8
        %s269 = scalar_lea.vmem [#allocation2], %s268
        %p270 = scmp.lt.s32.totalorder %s21, 1
        %s271 = scalar_select %p270, %s21, 1
        %s272 = smul.addr %s271, 8
        %s273 = scalar_lea.vmem %s0, %s272
        %v275 = vld [vmem:[%s273] sm:$0xff]
        %vm276 = vcmask 261120
        %v277 = vsel %vm276, %v275, 0.0
        %278 = vadd.xlane.f32.xlu0 %v277
        %v279 = vpop.xlane.xlu0 %278
        %v280 = vrcp.pop 32.0
        %v281 = vmul.f32 %v279, %v280
        %v282 = vmul.f32 %v275, %v275
        %v283 = vsel %vm276, %v282, 0.0
        %284 = vadd.xlane.f32.xlu0 %v283
        %v285 = vpop.xlane.xlu0 %284
        %v286 = vmul.f32 %v285, %v280
        %v287 = vmul.f32 %v281, %v281
        %v288 = vsub.f32 %v286, %v287
        %v289 = vmax.f32 %v288, 0.0
        %v290 = vadd.f32 %v289, 1e-05
        %v291 = vrsqrt.pop %v290
        %v292 = vld [vmem:[%s1] sm:$0x1]
        %v294 = vlaneseq
        %v295 = vshrl.u32 %v294, 7
        %v296 = vsub.s32 0, %v295
        %v297 = vrot.slane %v292, %v296
        %v299 = vmul.f32 %v291, %v297
        %v300 = vsub.f32 %v275, %v281
        %v301 = vmul.f32 %v300, %v299
        %v302 = vld [vmem:[%s2] sm:$0x1]
        %v304 = vlaneseq
        %v305 = vshrl.u32 %v304, 7
        %v306 = vsub.s32 0, %v305
        %v307 = vrot.slane %v302, %v306
        %v309 = vadd.f32 %v301, %v307
        %v310 = vpack.c.bf16 %v309, %v309
        %v311 = vld [vmem:[%s3] sm:$0xf]
        %v312 = vld [vmem:[%s3 + $0x4] sm:$0xf]
        %v313 = vld [vmem:[%s3 + $0x8] sm:$0xf]
        %v314 = vld [vmem:[%s3 + $0xc] sm:$0xf]
        %v315 = vld [vmem:[%s4] sm:$0x1]
        %v317 = vlaneseq
        %v318 = vshrl.u32 %v317, 7
        %v319 = vsub.s32 0, %v318
        %v320 = vrot.slane %v315, %v319
        %v326 = vunpack.c.l.b16 %v311
        %v327 = vunpack.c.l.b16 %v312
        %v328 = vunpack.c.l.b16 %v313
        %v329 = vunpack.c.l.b16 %v314
        %v330 = vpack.c.b16 %v327, %v326
        %v331 = vpack.c.b16 %v329, %v328
        %v335 = vsel %vm276, %v310, 0
        %337 = vmatprep.subr.bf16.mxu0 0
        %338 = vmatpush1.bf16.msra.mxu0 0
        %339 = vmatprep.subr.bf16.mxu0 0
        %340 = vmatpush1.bf16.msra.mxu0 0
        %341 = vmatprep.subr.bf16.mxu0 0
        %342 = vmatpush1.bf16.msra.mxu0 0
        %343 = vmatprep.subr.bf16.mxu0 0
        %344 = vmatpush1.bf16.msra.mxu0 0
        %345 = vmatprep.subr.bf16.mxu0 0
        %346 = vmatpush1.bf16.msra.mxu0 0
        %347 = vmatprep.subr.bf16.mxu0 0
        %348 = vmatpush1.bf16.msra.mxu0 0
        %349 = vmatprep.subr.bf16.mxu0 0
        %350 = vmatpush1.bf16.msra.mxu0 %v331
        %351 = vmatprep.subr.bf16.mxu0 0
        %352 = vmatpush1.bf16.msra.mxu0 %v330
        %353 = vmatprep.subr.bf16.mxu0 0
        %354 = vmatpush2.bf16.msra.mxu0 0
        %355 = vmatprep.subr.bf16.mxu0 0
        %356 = vmatpush2.bf16.msra.mxu0 0
        %357 = vmatprep.subr.bf16.mxu0 0
        %358 = vmatpush2.bf16.msra.mxu0 0
        %359 = vmatprep.subr.bf16.mxu0 0
        %360 = vmatpush2.bf16.msra.mxu0 0
        %361 = vmatprep.subr.bf16.mxu0 0
        %362 = vmatpush2.bf16.msra.mxu0 0
        %363 = vmatprep.subr.bf16.mxu0 0
        %364 = vmatpush2.bf16.msra.mxu0 0
        %365 = vmatprep.subr.bf16.mxu0 0
        %366 = vmatpush2.bf16.msra.mxu0 0
        %367 = vmatprep.subr.bf16.mxu0 0
        %368 = vmatpush2.bf16.msra.mxu0 0
        %369 = vmatprep.mubr.bf16.mxu0 0
        %370 = vmatmul.mubr.bf16.gmra.mxu0 %v335
        %v371 = vpop.f32.mrf.mxu0
        %v372 = vadd.f32 %v320, %v371
        %v373 = vpop.f32.mrf.mxu0
        %v374 = vpop.f32.mrf.mxu0
        %v375 = vpop.f32.mrf.mxu0
        %376 = vdwg.mxu0
        %v377 = vmax.f32 %v372, 0.0
        %v378 = vpack.c.bf16 %v377, %v377
        %v379 = vld [vmem:[%s5] sm:$0xf]
        %v380 = vld [vmem:[%s5 + $0x4] sm:$0xf]
        %v381 = vld [vmem:[%s5 + $0x8] sm:$0xf]
        %v382 = vld [vmem:[%s5 + $0xc] sm:$0xf]
        %v383 = vld [vmem:[%s5 + $0x10] sm:$0xf]
        %v384 = vld [vmem:[%s5 + $0x14] sm:$0xf]
        %v385 = vld [vmem:[%s5 + $0x18] sm:$0xf]
        %v386 = vld [vmem:[%s5 + $0x1c] sm:$0xf]
        %v387 = vld [vmem:[%s5 + $0x20] sm:$0xf]
        %v388 = vld [vmem:[%s5 + $0x24] sm:$0xf]
        %v389 = vld [vmem:[%s5 + $0x28] sm:$0xf]
        %v390 = vld [vmem:[%s5 + $0x2c] sm:$0xf]
        %v391 = vld [vmem:[%s5 + $0x30] sm:$0xf]
        %v392 = vld [vmem:[%s5 + $0x34] sm:$0xf]
        %v393 = vld [vmem:[%s5 + $0x38] sm:$0xf]
        %v394 = vld [vmem:[%s5 + $0x3c] sm:$0xf]
        %v395 = vld [vmem:[%s6] sm:$0x1]
        %v397 = vlaneseq
        %v398 = vshrl.u32 %v397, 7
        %v399 = vsub.s32 0, %v398
        %v400 = vrot.slane %v395, %v399
        %v418 = vunpack.c.l.b16 %v379
        %v419 = vunpack.c.l.b16 %v380
        %v420 = vunpack.c.l.b16 %v381
        %v421 = vunpack.c.l.b16 %v382
        %v422 = vunpack.c.l.b16 %v383
        %v423 = vunpack.c.l.b16 %v384
        %v424 = vunpack.c.l.b16 %v385
        %v425 = vunpack.c.l.b16 %v386
        %v426 = vunpack.c.l.b16 %v387
        %v427 = vunpack.c.l.b16 %v388
        %v428 = vunpack.c.l.b16 %v389
        %v429 = vunpack.c.l.b16 %v390
        %v430 = vunpack.c.l.b16 %v391
        %v431 = vunpack.c.l.b16 %v392
        %v432 = vunpack.c.l.b16 %v393
        %v433 = vunpack.c.l.b16 %v394
        %v434 = vpack.c.b16 %v419, %v418
        %v435 = vpack.c.b16 %v421, %v420
        %v436 = vpack.c.b16 %v423, %v422
        %v437 = vpack.c.b16 %v425, %v424
        %v438 = vpack.c.b16 %v427, %v426
        %v439 = vpack.c.b16 %v429, %v428
        %v440 = vpack.c.b16 %v431, %v430
        %v441 = vpack.c.b16 %v433, %v432
        %450 = vmatprep.subr.bf16.mxu0 0
        %451 = vmatpush1.bf16.msra.mxu0 %v441
        %452 = vmatprep.subr.bf16.mxu0 0
        %453 = vmatpush1.bf16.msra.mxu0 %v440
        %454 = vmatprep.subr.bf16.mxu0 0
        %455 = vmatpush1.bf16.msra.mxu0 %v439
        %456 = vmatprep.subr.bf16.mxu0 0
        %457 = vmatpush1.bf16.msra.mxu0 %v438
        %458 = vmatprep.subr.bf16.mxu0 0
        %459 = vmatpush1.bf16.msra.mxu0 %v437
        %460 = vmatprep.subr.bf16.mxu0 0
        %461 = vmatpush1.bf16.msra.mxu0 %v436
        %462 = vmatprep.subr.bf16.mxu0 0
        %463 = vmatpush1.bf16.msra.mxu0 %v435
        %464 = vmatprep.subr.bf16.mxu0 0
        %465 = vmatpush1.bf16.msra.mxu0 %v434
        %466 = vmatprep.subr.bf16.mxu0 0
        %467 = vmatpush2.bf16.msra.mxu0 0
        %468 = vmatprep.subr.bf16.mxu0 0
        %469 = vmatpush2.bf16.msra.mxu0 0
        %470 = vmatprep.subr.bf16.mxu0 0
        %471 = vmatpush2.bf16.msra.mxu0 0
        %472 = vmatprep.subr.bf16.mxu0 0
        %473 = vmatpush2.bf16.msra.mxu0 0
        %474 = vmatprep.subr.bf16.mxu0 0
        %475 = vmatpush2.bf16.msra.mxu0 0
        %476 = vmatprep.subr.bf16.mxu0 0
        %477 = vmatpush2.bf16.msra.mxu0 0
        %478 = vmatprep.subr.bf16.mxu0 0
        %479 = vmatpush2.bf16.msra.mxu0 0
        %480 = vmatprep.subr.bf16.mxu0 0
        %481 = vmatpush2.bf16.msra.mxu0 0
        %482 = vmatprep.mubr.bf16.mxu0 0
        %483 = vmatmul.mubr.bf16.gmra.mxu0 %v378
        %v484 = vpop.f32.mrf.mxu0
        %v485 = vadd.f32 %v400, %v484
        %v486 = vpop.f32.mrf.mxu0
        %v487 = vpop.f32.mrf.mxu0
        %v488 = vpop.f32.mrf.mxu0
        %489 = vdwg.mxu0
        %v490 = vadd.f32 %v485, %v275
        %491 = vst.msk [vmem:[%s269] sm:$0xff] %vm276, %v490
        %s492 = sand.u32 %s181, 1
        %s493 = scalar_lea.sflag [#allocation3], %s492
        %s494 = sand.u32 %s181, 1
        %s495 = smul.addr %s494, 8
        %s496 = scalar_lea.vmem [#allocation2], %s495
        // Predicated region
        $region49: #{tpu_custom_call.1} parent=47 // pred_check
          %p497 = pneg %p191
        $region50: #{tpu_custom_call.1} parent=47 // pred_check_branch
          %499 = sbr.rel (%p497) target = $region52
        $region51: #{tpu_custom_call.1} parent=47 // pred_region
          %s501 = ssub.s32 128, 128
          %502 = vsyncadd %s493, %s501
          %s503 = smul.addr %s21, 128
          %s504 = scalar_lea.hbm %s7, %s503
          %s506 = sshll.u32 %s496, 4
          %s507 = int_to_ptr.vmem [resolvable:$true] %s506
          %509 = dma.vmem_to_hbm [thread:$0]  %s507, 128, %s504, %s493
        $region52: #{tpu_custom_call.1} parent=47 // pred_fallthru
          _
      $region48: #{tpu_custom_call.1} parent=5 // pred_fallthru
        _
      %p510 = scmp.le.s32.totalorder 2, %s16
      // Predicated region
      $region53: #{tpu_custom_call.1} parent=5 // pred_check
        %p511 = pneg %p510
      $region54: #{tpu_custom_call.1} parent=5 // pred_check_branch
        %513 = sbr.rel (%p511) target = $region56
      $region55: #{tpu_custom_call.1} parent=5 // pred_region
        %s514 = ssub.s32 %s16, 2
        // Predicated region
        $region57: #{tpu_custom_call.1} parent=55 // pred_check
          %p515 = pneg %p197
        $region58: #{tpu_custom_call.1} parent=55 // pred_check_branch
          %517 = sbr.rel (%p515) target = $region60
        $region59: #{tpu_custom_call.1} parent=55 // pred_region
          %s518 = sand.u32 %s182, 1
          %s519 = scalar_lea.sflag [#allocation3], %s518
          %s520 = sand.u32 %s182, 1
          %s521 = smul.addr %s520, 8
          %s522 = scalar_lea.vmem [#allocation2], %s521
          %523 = dma.done %s519, 128
        $region60: #{tpu_custom_call.1} parent=55 // pred_fallthru
          _
      $region56: #{tpu_custom_call.1} parent=5 // pred_fallthru
        _
    $region6: #{tpu_custom_call.1} parent=1 // loop_footer
      %s20 = sadd.s32 1, %s16
    $region7: #{tpu_custom_call.1} parent=1 // loop_footer_branch
      %15 = sbr.rel target = $region3
    $region8: #{tpu_custom_call.1} parent=1 // loop_exit
      _
    %524 = vsyncpa [#allocation3], 1
    %s525 = scalar_lea.sflag [#allocation3], 1
    %526 = vsyncpa %s525, 1

// kernel: tpu_custom_call.1
$region0: #{tpu_custom_call.1}
  #allocation0 [shape = 'u32[]', space=smem, size = 0x4, offset = 0x4, fixed_abs, tag = 'smem constant byte address 0x4 - core index']
  #allocation1 [shape = 'u32[144,128]{1,0:T(1,128)}', space=vmem, size = 0x12000, scoped, tag = 'internal scratch']
  %s0 = inlined_call_operand.vmem [shape: f32[16,32], index: 0, kind: input, shape index: {}]
  %s1 = inlined_call_operand.vmem [shape: f32[1,32], index: 1, kind: input, shape index: {}]
  %s2 = inlined_call_operand.vmem [shape: f32[1,32], index: 2, kind: input, shape index: {}]
  %s3 = inlined_call_operand.vmem [shape: bf16[32,128], index: 3, kind: input, shape index: {}]
  %s4 = inlined_call_operand.vmem [shape: f32[1,128], index: 4, kind: input, shape index: {}]
  %s5 = inlined_call_operand.vmem [shape: bf16[128,32], index: 5, kind: input, shape index: {}]
  %s6 = inlined_call_operand.vmem [shape: f32[1,32], index: 6, kind: input, shape index: {}]
  %s7 = inlined_call_operand.hbm [shape: f32[16,32], index: 7, kind: output, shape index: {}]
  %s8 = sld [smem:[#allocation0]]
  $region61: #{tpu_custom_call.1} parent=0
    _
  %s10 = ssub.s32 1, %s8
  %s11 = scalar_select 0, %s10, %s8
  $region1: #{tpu_custom_call.1} parent=0
    #allocation2 [shape = 'u8[8192]{0}', space=vmem, size = 0x2000, scoped, tag = 'output window, operand 0']
    #allocation3 [shape = 's32[2]{0}', space=sflag, size = 0x8, scoped, tag = 'scoped memory for tpu_custom_call.1']
    %12 = vsyncpa [#allocation3], 0
    %s13 = scalar_lea.sflag [#allocation3], 1
    %14 = vsyncpa %s13, 0
    loop: start=0, step=1, limit=4
    $region2: #{tpu_custom_call.1} parent=1 // loop_pre_header
      _
    $region3: #{tpu_custom_call.1} parent=1 // loop_header
      %s16 = sphi 0, %s20
      %p17 = scmp.ge.s32.totalorder %s16, 4
      %s26 = sphi 0, %s28
      %s29 = sphi 0, %s26
      %s30 = sphi 0, %s29
      %s46 = sphi 0, %s30
      %s50 = sphi 0, %s50
      %s52 = sphi 0, %s50
      %s53 = sphi 0, %s52
      %s67 = sphi 0, %s53
      %s71 = sphi 0, %s71
      %s73 = sphi 0, %s71
      %s74 = sphi 0, %s73
      %s88 = sphi 0, %s74
      %s92 = sphi 0, %s92
      %s94 = sphi 0, %s92
      %s95 = sphi 0, %s94
      %s109 = sphi 0, %s95
      %s113 = sphi 0, %s113
      %s115 = sphi 0, %s113
      %s116 = sphi 0, %s115
      %s130 = sphi 0, %s116
      %s134 = sphi 0, %s134
      %s136 = sphi 0, %s134
      %s137 = sphi 0, %s136
      %s151 = sphi 0, %s137
      %s155 = sphi 0, %s155
      %s157 = sphi 0, %s155
      %s158 = sphi 0, %s157
      %s172 = sphi 0, %s158
      %s178 = sphi 0, %s180
      %s181 = sphi 0, %s178
      %s182 = sphi 0, %s181
      %s198 = sphi 0, %s182
    $region4: #{tpu_custom_call.1} parent=1 // loop_header_branch
      %19 = sbr.rel (%p17) target = $region8
    $region5: #{tpu_custom_call.1} parent=1 // loop_body
      %s21 = ssub.s32 %s16, 1
      %s22 = ssub.s32 %s16, 2
      %s23 = sadd.s32 %s16, 1
      %s24 = ssub.s32 %s16, %s23
      %p25 = scmp.eq.s32.totalorder %s24, 0
      %s27 = sadd.s32 %s26, 1
      %s28 = scalar_select %p25, %s26, %s27
      %p31 = pneg %p25
      %p32 = scmp.eq.s32.totalorder %s16, 1
      %p33 = por %p31, %p32
      %p34 = scmp.ne.s32.totalorder %s26, %s29
      %p35 = scmp.eq.s32.totalorder %s16, 0
      %p36 = por %p34, %p35
      %p37 = scmp.ne.s32.totalorder %s26, %s29
      %p38 = scmp.eq.s32.totalorder %s21, 1
      %p39 = por %p37, %p38
      %p40 = scmp.ne.s32.totalorder %s29, %s30
      %p41 = scmp.eq.s32.totalorder %s21, 0
      %p42 = por %p40, %p41
      %p43 = scmp.ne.s32.totalorder %s29, %s30
      %p44 = scmp.eq.s32.totalorder %s22, 1
      %p45 = por %p43, %p44
      %p47 = scmp.ne.s32.totalorder %s30, %s46
      %p48 = scmp.eq.s32.totalorder %s22, 0
      %p49 = por %p47, %p48
      %s51 = sadd.s32 %s50, 1
      %p54 = scmp.eq.s32.totalorder %s16, 1
      %p55 = scmp.ne.s32.totalorder %s50, %s52
      %p56 = scmp.eq.s32.totalorder %s16, 0
      %p57 = por %p55, %p56
      %p58 = scmp.ne.s32.totalorder %s50, %s52
      %p59 = scmp.eq.s32.totalorder %s21, 1
      %p60 = por %p58, %p59
      %p61 = scmp.ne.s32.totalorder %s52, %s53
      %p62 = scmp.eq.s32.totalorder %s21, 0
      %p63 = por %p61, %p62
      %p64 = scmp.ne.s32.totalorder %s52, %s53
      %p65 = scmp.eq.s32.totalorder %s22, 1
      %p66 = por %p64, %p65
      %p68 = scmp.ne.s32.totalorder %s53, %s67
      %p69 = scmp.eq.s32.totalorder %s22, 0
      %p70 = por %p68, %p69
      %s72 = sadd.s32 %s71, 1
      %p75 = scmp.eq.s32.totalorder %s16, 1
      %p76 = scmp.ne.s32.totalorder %s71, %s73
      %p77 = scmp.eq.s32.totalorder %s16, 0
      %p78 = por %p76, %p77
      %p79 = scmp.ne.s32.totalorder %s71, %s73
      %p80 = scmp.eq.s32.totalorder %s21, 1
      %p81 = por %p79, %p80
      %p82 = scmp.ne.s32.totalorder %s73, %s74
      %p83 = scmp.eq.s32.totalorder %s21, 0
      %p84 = por %p82, %p83
      %p85 = scmp.ne.s32.totalorder %s73, %s74
      %p86 = scmp.eq.s32.totalorder %s22, 1
      %p87 = por %p85, %p86
      %p89 = scmp.ne.s32.totalorder %s74, %s88
      %p90 = scmp.eq.s32.totalorder %s22, 0
      %p91 = por %p89, %p90
      %s93 = sadd.s32 %s92, 1
      %p96 = scmp.eq.s32.totalorder %s16, 1
      %p97 = scmp.ne.s32.totalorder %s92, %s94
      %p98 = scmp.eq.s32.totalorder %s16, 0
      %p99 = por %p97, %p98
      %p100 = scmp.ne.s32.totalorder %s92, %s94
      %p101 = scmp.eq.s32.totalorder %s21, 1
      %p102 = por %p100, %p101
      %p103 = scmp.ne.s32.totalorder %s94, %s95
      %p104 = scmp.eq.s32.totalorder %s21, 0
      %p105 = por %p103, %p104
      %p106 = scmp.ne.s32.totalorder %s94, %s95
      %p107 = scmp.eq.s32.totalorder %s22, 1
      %p108 = por %p106, %p107
      %p110 = scmp.ne.s32.totalorder %s95, %s109
      %p111 = scmp.eq.s32.totalorder %s22, 0
      %p112 = por %p110, %p111
      %s114 = sadd.s32 %s113, 1
      %p117 = scmp.eq.s32.totalorder %s16, 1
      %p118 = scmp.ne.s32.totalorder %s113, %s115
      %p119 = scmp.eq.s32.totalorder %s16, 0
      %p120 = por %p118, %p119
      %p121 = scmp.ne.s32.totalorder %s113, %s115
      %p122 = scmp.eq.s32.totalorder %s21, 1
      %p123 = por %p121, %p122
      %p124 = scmp.ne.s32.totalorder %s115, %s116
      %p125 = scmp.eq.s32.totalorder %s21, 0
      %p126 = por %p124, %p125
      %p127 = scmp.ne.s32.totalorder %s115, %s116
      %p128 = scmp.eq.s32.totalorder %s22, 1
      %p129 = por %p127, %p128
      %p131 = scmp.ne.s32.totalorder %s116, %s130
      %p132 = scmp.eq.s32.totalorder %s22, 0
      %p133 = por %p131, %p132
      %s135 = sadd.s32 %s134, 1
      %p138 = scmp.eq.s32.totalorder %s16, 1
      %p139 = scmp.ne.s32.totalorder %s134, %s136
      %p140 = scmp.eq.s32.totalorder %s16, 0
      %p141 = por %p139, %p140
      %p142 = scmp.ne.s32.totalorder %s134, %s136
      %p143 = scmp.eq.s32.totalorder %s21, 1
      %p144 = por %p142, %p143
      %p145 = scmp.ne.s32.totalorder %s136, %s137
      %p146 = scmp.eq.s32.totalorder %s21, 0
      %p147 = por %p145, %p146
      %p148 = scmp.ne.s32.totalorder %s136, %s137
      %p149 = scmp.eq.s32.totalorder %s22, 1
      %p150 = por %p148, %p149
      %p152 = scmp.ne.s32.totalorder %s137, %s151
      %p153 = scmp.eq.s32.totalorder %s22, 0
      %p154 = por %p152, %p153
      %s156 = sadd.s32 %s155, 1
      %p159 = scmp.eq.s32.totalorder %s16, 1
      %p160 = scmp.ne.s32.totalorder %s155, %s157
      %p161 = scmp.eq.s32.totalorder %s16, 0
      %p162 = por %p160, %p161
      %p163 = scmp.ne.s32.totalorder %s155, %s157
      %p164 = scmp.eq.s32.totalorder %s21, 1
      %p165 = por %p163, %p164
      %p166 = scmp.ne.s32.totalorder %s157, %s158
      %p167 = scmp.eq.s32.totalorder %s21, 0
      %p168 = por %p166, %p167
      %p169 = scmp.ne.s32.totalorder %s157, %s158
      %p170 = scmp.eq.s32.totalorder %s22, 1
      %p171 = por %p169, %p170
      %p173 = scmp.ne.s32.totalorder %s158, %s172
      %p174 = scmp.eq.s32.totalorder %s22, 0
      %p175 = por %p173, %p174
      %s176 = ssub.s32 %s16, %s23
      %p177 = scmp.eq.s32.totalorder %s176, 0
      %s179 = sadd.s32 %s178, 1
      %s180 = scalar_select %p177, %s178, %s179
      %p183 = pneg %p177
      %p184 = scmp.eq.s32.totalorder %s16, 1
      %p185 = por %p183, %p184
      %p186 = scmp.ne.s32.totalorder %s178, %s181
      %p187 = scmp.eq.s32.totalorder %s16, 0
      %p188 = por %p186, %p187
      %p189 = scmp.ne.s32.totalorder %s178, %s181
      %p190 = scmp.eq.s32.totalorder %s21, 1
      %p191 = por %p189, %p190
      %p192 = scmp.ne.s32.totalorder %s181, %s182
      %p193 = scmp.eq.s32.totalorder %s21, 0
      %p194 = por %p192, %p193
      %p195 = scmp.ne.s32.totalorder %s181, %s182
      %p196 = scmp.eq.s32.totalorder %s22, 1
      %p197 = por %p195, %p196
      %p199 = scmp.ne.s32.totalorder %s182, %s198
      %p200 = scmp.eq.s32.totalorder %s22, 0
      %p201 = por %p199, %p200
      %p202 = scmp.le.s32.totalorder 1, %s16
      %p203 = scmp.lt.s32.totalorder %s16, 3
      %p204 = pnand %p202, %p203
      %p205 = pneg %p204
      // Predicated region
      $region9: #{tpu_custom_call.1} parent=5 // pred_check
        _
      $region10: #{tpu_custom_call.1} parent=5 // pred_check_branch
        %207 = sbr.rel (%p204) target = $region12
      $region11: #{tpu_custom_call.1} parent=5 // pred_region
        %s208 = ssub.s32 %s16, 1
        // Predicated region
        $region13: #{tpu_custom_call.1} parent=11 // pred_check
          %p209 = pneg %p63
        $region14: #{tpu_custom_call.1} parent=11 // pred_check_branch
          %211 = sbr.rel (%p209) target = $region16
        $region15: #{tpu_custom_call.1} parent=11 // pred_region
          _
        $region16: #{tpu_custom_call.1} parent=11 // pred_fallthru
          _
        // Predicated region
        $region17: #{tpu_custom_call.1} parent=11 // pred_check
          %p212 = pneg %p84
        $region18: #{tpu_custom_call.1} parent=11 // pred_check_branch
          %214 = sbr.rel (%p212) target = $region20
        $region19: #{tpu_custom_call.1} parent=11 // pred_region
          _
        $region20: #{tpu_custom_call.1} parent=11 // pred_fallthru
          _
        // Predicated region
        $region21: #{tpu_custom_call.1} parent=11 // pred_check
          %p215 = pneg %p105
        $region22: #{tpu_custom_call.1} parent=11 // pred_check_branch
          %217 = sbr.rel (%p215) target = $region24
        $region23: #{tpu_custom_call.1} parent=11 // pred_region
          _
        $region24: #{tpu_custom_call.1} parent=11 // pred_fallthru
          _
        // Predicated region
        $region25: #{tpu_custom_call.1} parent=11 // pred_check
          %p218 = pneg %p126
        $region26: #{tpu_custom_call.1} parent=11 // pred_check_branch
          %220 = sbr.rel (%p218) target = $region28
        $region27: #{tpu_custom_call.1} parent=11 // pred_region
          _
        $region28: #{tpu_custom_call.1} parent=11 // pred_fallthru
          _
        // Predicated region
        $region29: #{tpu_custom_call.1} parent=11 // pred_check
          %p221 = pneg %p147
        $region30: #{tpu_custom_call.1} parent=11 // pred_check_branch
          %223 = sbr.rel (%p221) target = $region32
        $region31: #{tpu_custom_call.1} parent=11 // pred_region
          _
        $region32: #{tpu_custom_call.1} parent=11 // pred_fallthru
          _
        // Predicated region
        $region33: #{tpu_custom_call.1} parent=11 // pred_check
          %p224 = pneg %p168
        $region34: #{tpu_custom_call.1} parent=11 // pred_check_branch
          %226 = sbr.rel (%p224) target = $region36
        $region35: #{tpu_custom_call.1} parent=11 // pred_region
          _
        $region36: #{tpu_custom_call.1} parent=11 // pred_fallthru
          _
      $region12: #{tpu_custom_call.1} parent=5 // pred_fallthru
        _
      %p227 = scmp.lt.s32.totalorder %s16, 2
      // Predicated region
      $region37: #{tpu_custom_call.1} parent=5 // pred_check
        %p228 = pneg %p227
      $region38: #{tpu_custom_call.1} parent=5 // pred_check_branch
        %230 = sbr.rel (%p228) target = $region40
      $region39: #{tpu_custom_call.1} parent=5 // pred_region
        // Predicated region
        $region41: #{tpu_custom_call.1} parent=39 // pred_check
          %p231 = pneg %p36
        $region42: #{tpu_custom_call.1} parent=39 // pred_check_branch
          %233 = sbr.rel (%p231) target = $region44
        $region43: #{tpu_custom_call.1} parent=39 // pred_region
          %p234 = scmp.lt.s32.totalorder %s16, 1
          %s235 = scalar_select %p234, %s16, 1
          %s236 = smul.addr %s235, 8
          %s237 = scalar_lea.vmem %s0, %s236
        $region44: #{tpu_custom_call.1} parent=39 // pred_fallthru
          _
      $region40: #{tpu_custom_call.1} parent=5 // pred_fallthru
        _
      %p238 = scmp.le.s32.totalorder 1, %s16
      %p239 = scmp.lt.s32.totalorder %s16, 3
      %p240 = pnand %p238, %p239
      %p241 = pneg %p240
      // Predicated region
      $region45: #{tpu_custom_call.1} parent=5 // pred_check
        _
      $region46: #{tpu_custom_call.1} parent=5 // pred_check_branch
        %243 = sbr.rel (%p240) target = $region48
      $region47: #{tpu_custom_call.1} parent=5 // pred_region
        %s244 = ssub.s32 %s16, 1
        %p245 = scmp.lt.s32.totalorder %s21, 1
        %s246 = scalar_select %p245, %s21, 1
        %s247 = smul.addr %s246, 8
        %s248 = scalar_lea.vmem %s0, %s247
        %p249 = pneg %p42
        %p250 = pneg %p39
        %p251 = pneg %p63
        %p252 = pneg %p60
        %p253 = pneg %p84
        %p254 = pneg %p81
        %p255 = pneg %p105
        %p256 = pneg %p102
        %p257 = pneg %p126
        %p258 = pneg %p123
        %p259 = pneg %p147
        %p260 = pneg %p144
        %p261 = pneg %p168
        %p262 = pneg %p165
        %p263 = pneg %p194
        %p264 = pneg %p191
        %s265 = sand.u32 %s181, 1
        %s266 = scalar_lea.sflag [#allocation3], %s265
        %s267 = sand.u32 %s181, 1
        %s268 = smul.addr %s267, 8
        %s269 = scalar_lea.vmem [#allocation2], %s268
        %p270 = scmp.lt.s32.totalorder %s21, 1
        %s271 = scalar_select %p270, %s21, 1
        %s272 = smul.addr %s271, 8
        %s273 = scalar_lea.vmem %s0, %s272
        %v275 = vld [vmem:[%s273] sm:$0xff]
        %vm276 = vcmask 261120
        %v277 = vsel %vm276, %v275, 0.0
        %278 = vadd.xlane.f32.xlu0 %v277
        %v279 = vpop.xlane.xlu0 %278
        %v280 = vrcp.pop 32.0
        %v281 = vmul.f32 %v279, %v280
        %v282 = vmul.f32 %v275, %v275
        %v283 = vsel %vm276, %v282, 0.0
        %284 = vadd.xlane.f32.xlu0 %v283
        %v285 = vpop.xlane.xlu0 %284
        %v286 = vmul.f32 %v285, %v280
        %v287 = vmul.f32 %v281, %v281
        %v288 = vsub.f32 %v286, %v287
        %v289 = vmax.f32 %v288, 0.0
        %v290 = vadd.f32 %v289, 1e-05
        %v291 = vrsqrt.pop %v290
        %v292 = vld [vmem:[%s1] sm:$0x1]
        %v294 = vlaneseq
        %v295 = vshrl.u32 %v294, 7
        %v296 = vsub.s32 0, %v295
        %v297 = vrot.slane %v292, %v296
        %v299 = vmul.f32 %v291, %v297
        %v300 = vsub.f32 %v275, %v281
        %v301 = vmul.f32 %v300, %v299
        %v302 = vld [vmem:[%s2] sm:$0x1]
        %v304 = vlaneseq
        %v305 = vshrl.u32 %v304, 7
        %v306 = vsub.s32 0, %v305
        %v307 = vrot.slane %v302, %v306
        %v309 = vadd.f32 %v301, %v307
        %v310 = vpack.c.bf16 %v309, %v309
        %v311 = vld [vmem:[%s3] sm:$0xf]
        %v312 = vld [vmem:[%s3 + $0x4] sm:$0xf]
        %v313 = vld [vmem:[%s3 + $0x8] sm:$0xf]
        %v314 = vld [vmem:[%s3 + $0xc] sm:$0xf]
        %v315 = vld [vmem:[%s4] sm:$0x1]
        %v317 = vlaneseq
        %v318 = vshrl.u32 %v317, 7
        %v319 = vsub.s32 0, %v318
        %v320 = vrot.slane %v315, %v319
        %v326 = vunpack.c.l.b16 %v311
        %v327 = vunpack.c.l.b16 %v312
        %v328 = vunpack.c.l.b16 %v313
        %v329 = vunpack.c.l.b16 %v314
        %v330 = vpack.c.b16 %v327, %v326
        %v331 = vpack.c.b16 %v329, %v328
        %v335 = vsel %vm276, %v310, 0
        %337 = vmatprep.subr.bf16.mxu0 0
        %338 = vmatpush1.bf16.msra.mxu0 0
        %339 = vmatprep.subr.bf16.mxu0 0
        %340 = vmatpush1.bf16.msra.mxu0 0
        %341 = vmatprep.subr.bf16.mxu0 0
        %342 = vmatpush1.bf16.msra.mxu0 0
        %343 = vmatprep.subr.bf16.mxu0 0
        %344 = vmatpush1.bf16.msra.mxu0 0
        %345 = vmatprep.subr.bf16.mxu0 0
        %346 = vmatpush1.bf16.msra.mxu0 0
        %347 = vmatprep.subr.bf16.mxu0 0
        %348 = vmatpush1.bf16.msra.mxu0 0
        %349 = vmatprep.subr.bf16.mxu0 0
        %350 = vmatpush1.bf16.msra.mxu0 %v331
        %351 = vmatprep.subr.bf16.mxu0 0
        %352 = vmatpush1.bf16.msra.mxu0 %v330
        %353 = vmatprep.subr.bf16.mxu0 0
        %354 = vmatpush2.bf16.msra.mxu0 0
        %355 = vmatprep.subr.bf16.mxu0 0
        %356 = vmatpush2.bf16.msra.mxu0 0
        %357 = vmatprep.subr.bf16.mxu0 0
        %358 = vmatpush2.bf16.msra.mxu0 0
        %359 = vmatprep.subr.bf16.mxu0 0
        %360 = vmatpush2.bf16.msra.mxu0 0
        %361 = vmatprep.subr.bf16.mxu0 0
        %362 = vmatpush2.bf16.msra.mxu0 0
        %363 = vmatprep.subr.bf16.mxu0 0
        %364 = vmatpush2.bf16.msra.mxu0 0
        %365 = vmatprep.subr.bf16.mxu0 0
        %366 = vmatpush2.bf16.msra.mxu0 0
        %367 = vmatprep.subr.bf16.mxu0 0
        %368 = vmatpush2.bf16.msra.mxu0 0
        %369 = vmatprep.mubr.bf16.mxu0 0
        %370 = vmatmul.mubr.bf16.gmra.mxu0 %v335
        %v371 = vpop.f32.mrf.mxu0
        %v372 = vadd.f32 %v320, %v371
        %v373 = vpop.f32.mrf.mxu0
        %v374 = vpop.f32.mrf.mxu0
        %v375 = vpop.f32.mrf.mxu0
        %376 = vdwg.mxu0
        %v377 = vmax.f32 %v372, 0.0
        %v378 = vpack.c.bf16 %v377, %v377
        %v379 = vld [vmem:[%s5] sm:$0xf]
        %v380 = vld [vmem:[%s5 + $0x4] sm:$0xf]
        %v381 = vld [vmem:[%s5 + $0x8] sm:$0xf]
        %v382 = vld [vmem:[%s5 + $0xc] sm:$0xf]
        %v383 = vld [vmem:[%s5 + $0x10] sm:$0xf]
        %v384 = vld [vmem:[%s5 + $0x14] sm:$0xf]
        %v385 = vld [vmem:[%s5 + $0x18] sm:$0xf]
        %v386 = vld [vmem:[%s5 + $0x1c] sm:$0xf]
        %v387 = vld [vmem:[%s5 + $0x20] sm:$0xf]
        %v388 = vld [vmem:[%s5 + $0x24] sm:$0xf]
        %v389 = vld [vmem:[%s5 + $0x28] sm:$0xf]
        %v390 = vld [vmem:[%s5 + $0x2c] sm:$0xf]
        %v391 = vld [vmem:[%s5 + $0x30] sm:$0xf]
        %v392 = vld [vmem:[%s5 + $0x34] sm:$0xf]
        %v393 = vld [vmem:[%s5 + $0x38] sm:$0xf]
        %v394 = vld [vmem:[%s5 + $0x3c] sm:$0xf]
        %v395 = vld [vmem:[%s6] sm:$0x1]
        %v397 = vlaneseq
        %v398 = vshrl.u32 %v397, 7
        %v399 = vsub.s32 0, %v398
        %v400 = vrot.slane %v395, %v399
        %v418 = vunpack.c.l.b16 %v379
        %v419 = vunpack.c.l.b16 %v380
        %v420 = vunpack.c.l.b16 %v381
        %v421 = vunpack.c.l.b16 %v382
        %v422 = vunpack.c.l.b16 %v383
        %v423 = vunpack.c.l.b16 %v384
        %v424 = vunpack.c.l.b16 %v385
        %v425 = vunpack.c.l.b16 %v386
        %v426 = vunpack.c.l.b16 %v387
        %v427 = vunpack.c.l.b16 %v388
        %v428 = vunpack.c.l.b16 %v389
        %v429 = vunpack.c.l.b16 %v390
        %v430 = vunpack.c.l.b16 %v391
        %v431 = vunpack.c.l.b16 %v392
        %v432 = vunpack.c.l.b16 %v393
        %v433 = vunpack.c.l.b16 %v394
        %v434 = vpack.c.b16 %v419, %v418
        %v435 = vpack.c.b16 %v421, %v420
        %v436 = vpack.c.b16 %v423, %v422
        %v437 = vpack.c.b16 %v425, %v424
        %v438 = vpack.c.b16 %v427, %v426
        %v439 = vpack.c.b16 %v429, %v428
        %v440 = vpack.c.b16 %v431, %v430
        %v441 = vpack.c.b16 %v433, %v432
        %450 = vmatprep.subr.bf16.mxu0 0
        %451 = vmatpush1.bf16.msra.mxu0 %v441
        %452 = vmatprep.subr.bf16.mxu0 0
        %453 = vmatpush1.bf16.msra.mxu0 %v440
        %454 = vmatprep.subr.bf16.mxu0 0
        %455 = vmatpush1.bf16.msra.mxu0 %v439
        %456 = vmatprep.subr.bf16.mxu0 0
        %457 = vmatpush1.bf16.msra.mxu0 %v438
        %458 = vmatprep.subr.bf16.mxu0 0
        %459 = vmatpush1.bf16.msra.mxu0 %v437
        %460 = vmatprep.subr.bf16.mxu0 0
        %461 = vmatpush1.bf16.msra.mxu0 %v436
        %462 = vmatprep.subr.bf16.mxu0 0
        %463 = vmatpush1.bf16.msra.mxu0 %v435
        %464 = vmatprep.subr.bf16.mxu0 0
        %465 = vmatpush1.bf16.msra.mxu0 %v434
        %466 = vmatprep.subr.bf16.mxu0 0
        %467 = vmatpush2.bf16.msra.mxu0 0
        %468 = vmatprep.subr.bf16.mxu0 0
        %469 = vmatpush2.bf16.msra.mxu0 0
        %470 = vmatprep.subr.bf16.mxu0 0
        %471 = vmatpush2.bf16.msra.mxu0 0
        %472 = vmatprep.subr.bf16.mxu0 0
        %473 = vmatpush2.bf16.msra.mxu0 0
        %474 = vmatprep.subr.bf16.mxu0 0
        %475 = vmatpush2.bf16.msra.mxu0 0
        %476 = vmatprep.subr.bf16.mxu0 0
        %477 = vmatpush2.bf16.msra.mxu0 0
        %478 = vmatprep.subr.bf16.mxu0 0
        %479 = vmatpush2.bf16.msra.mxu0 0
        %480 = vmatprep.subr.bf16.mxu0 0
        %481 = vmatpush2.bf16.msra.mxu0 0
        %482 = vmatprep.mubr.bf16.mxu0 0
        %483 = vmatmul.mubr.bf16.gmra.mxu0 %v378
        %v484 = vpop.f32.mrf.mxu0
        %v485 = vadd.f32 %v400, %v484
        %v486 = vpop.f32.mrf.mxu0
        %v487 = vpop.f32.mrf.mxu0
        %v488 = vpop.f32.mrf.mxu0
        %489 = vdwg.mxu0
        %v490 = vadd.f32 %v485, %v275
        %491 = vst.msk [vmem:[%s269] sm:$0xff] %vm276, %v490
        %s492 = sand.u32 %s181, 1
        %s493 = scalar_lea.sflag [#allocation3], %s492
        %s494 = sand.u32 %s181, 1
        %s495 = smul.addr %s494, 8
        %s496 = scalar_lea.vmem [#allocation2], %s495
        // Predicated region
        $region49: #{tpu_custom_call.1} parent=47 // pred_check
          %p497 = pneg %p191
        $region50: #{tpu_custom_call.1} parent=47 // pred_check_branch
          %499 = sbr.rel (%p497) target = $region52
        $region51: #{tpu_custom_call.1} parent=47 // pred_region
          %s501 = ssub.s32 128, 128
          %502 = vsyncadd %s493, %s501
          %s503 = smul.addr %s21, 128
          %s504 = scalar_lea.hbm %s7, %s503
          %s506 = sshll.u32 %s496, 4
          %s507 = int_to_ptr.vmem [resolvable:$true] %s506
          %509 = dma.vmem_to_hbm [thread:$0]  %s507, 128, %s504, %s493
        $region52: #{tpu_custom_call.1} parent=47 // pred_fallthru
          _
      $region48: #{tpu_custom_call.1} parent=5 // pred_fallthru
        _
      %p510 = scmp.le.s32.totalorder 2, %s16
      // Predicated region
      $region53: #{tpu_custom_call.1} parent=5 // pred_check
        %p511 = pneg %p510
      $region54: #{tpu_custom_call.1} parent=5 // pred_check_branch
        %513 = sbr.rel (%p511) target = $region56
      $region55: #{tpu_custom_call.1} parent=5 // pred_region
        %s514 = ssub.s32 %s16, 2
        // Predicated region
        $region57: #{tpu_custom_call.1} parent=55 // pred_check
          %p515 = pneg %p197
        $region58: #{tpu_custom_call.1} parent=55 // pred_check_branch
          %517 = sbr.rel (%p515) target = $region60
        $region59: #{tpu_custom_call.1} parent=55 // pred_region
          %s518 = sand.u32 %s182, 1
          %s519 = scalar_lea.sflag [#allocation3], %s518
          %s520 = sand.u32 %s182, 1
          %s521 = smul.addr %s520, 8
          %s522 = scalar_lea.vmem [#allocation2], %s521
          %523 = dma.done %s519, 128
        $region60: #{tpu_custom_call.1} parent=55 // pred_fallthru
          _
      $region56: #{tpu_custom_call.1} parent=5 // pred_fallthru
        _
    $region6: #{tpu_custom_call.1} parent=1 // loop_footer
      %s20 = sadd.s32 1, %s16
    $region7: #{tpu_custom_call.1} parent=1 // loop_footer_branch
      %15 = sbr.rel target = $region3
    $region8: #{tpu_custom_call.1} parent=1 // loop_exit
      _
    %524 = vsyncpa [#allocation3], 1
    %s525 = scalar_lea.sflag [#allocation3], 1
    %526 = vsyncpa %s525, 1

</llo_original>
